<compile_context>
chip_gen: v7x
topology: tpu7x:2x2x1
jax: 0.10.0
libtpu: 0.0.40
codegen_flags: <defaults>
</compile_context>

<pallas_src>
import jax
import jax.numpy as jnp
from jax.experimental import pallas as pl
from jax.experimental.pallas import tpu as pltpu

GROUP = 32          # batch rows packed per lane-dense (128-wide) output row
IN_F = 16           # fc1 input features
HID_F = 8           # fc1 output / fc2 input features
OUT_F = 4           # fc2 output features


def fused_linear_kernel(x_ref, w_ref, b_ref, o_ref):
    """Single fused pass: out = x @ W_blockdiag + b.

    x arrives f32 straight from HBM (no wrapper-side cast/pad copy); the bf16 cast
    happens here on the VPU, the MXU accumulates in f32, and the bias add / store
    stay f32 (avoids bf16 VPU work, which v5e lacks).
    """
    x = x_ref[...].astype(jnp.bfloat16)
    acc = jnp.dot(x, w_ref[...], preferred_element_type=jnp.float32)
    o_ref[...] = (acc + b_ref[...]).astype(o_ref.dtype)


def prepare_params(w1, b1, w2, b2):
    """One-time weight prep (hoisted out of the forward path; reuse across calls).

    w1: (16, 8), b1: (1, 8), w2: (8, 4), b2: (1, 4).
    Returns (w_bd, b_bd): lane-dense block-diagonal weight (512, 128) bf16 and the
    tiled bias (1, 128) f32 for the fused single-GEMM kernel.
    """
    W = w1 @ w2                       # (16, 4) — exact fold: no nonlinearity between layers
    b = b1 @ w2 + b2                  # (1, 4)
    # Wbd[(g*16+i), (h*4+o)] = (g==h) * W[i, o]   -> shape (512, 128)
    eye = jnp.eye(GROUP, dtype=W.dtype)
    w_bd = (eye[:, None, :, None] * W[None, :, None, :]).reshape(
        GROUP * IN_F, GROUP * OUT_F)
    b_bd = jnp.tile(b, (1, GROUP))    # (1, 128), column (h*4+o) == b[0, o]
    return w_bd.astype(jnp.bfloat16), b_bd.astype(jnp.float32)


def _lane_dense_call(x_rows, w_bd, b_bd, block_rows, out_dtype):
    """Run the fused GEMM over (rows, 512) lane-dense input rows."""
    rows = x_rows.shape[0]
    block_rows = max(16, (block_rows // 16) * 16)      # tile multiple of 16, >= 16
    if rows >= 16 and rows % 16 == 0:
        tr = min(block_rows, rows)
    elif rows > block_rows:
        tr = block_rows                                # last block is partial (handled by Pallas)
    else:
        tr = rows                                      # single block == full array dims
    grid = (pl.cdiv(rows, tr),)

    return pl.pallas_call(
        fused_linear_kernel,
        out_shape=jax.ShapeDtypeStruct((rows, GROUP * OUT_F), out_dtype),
        grid_spec=pltpu.PrefetchScalarGridSpec(
            num_scalar_prefetch=0,
            grid=grid,
            in_specs=[
                pl.BlockSpec((tr, GROUP * IN_F), lambda i: (i, 0)),             # x tile (f32)
                pl.BlockSpec((GROUP * IN_F, GROUP * OUT_F), lambda i: (0, 0)),  # weight (resident)
                pl.BlockSpec((1, GROUP * OUT_F), lambda i: (0, 0)),             # bias (resident)
            ],
            out_specs=pl.BlockSpec((tr, GROUP * OUT_F), lambda i: (i, 0)),
        ),
        compiler_params=pltpu.CompilerParams(
            dimension_semantics=("parallel",),   # v7x: shard row tiles across both TCs
        ),
    )(x_rows, w_bd, b_bd)


def toy_model_forward(x, prepared, *, block_rows=2048, out_dtype=jnp.float32):
    """Fused ToyModel forward: y = (x @ w1 + b1) @ w2 + b2, folded into one GEMM.

    x: (B, 16) float32.  `prepared` = prepare_params(w1, b1, w2, b2) (computed once).
    block_rows: lane-dense row tile (each row = 32 batch rows).  2048 suits v6e/v7x;
    512-1024 is enough on v5e.
    """
    w_bd, b_bd = prepared
    B, F = x.shape
    assert F == IN_F

    outs = []
    b_main = (B // GROUP) * GROUP
    if b_main:
        # Row-major (b_main,16) -> (b_main//32, 512) is a free metadata reshape: no copy.
        x_rows = x[:b_main].reshape(b_main // GROUP, GROUP * IN_F)
        out_rows = _lane_dense_call(x_rows, w_bd, b_bd, block_rows, out_dtype)
        outs.append(out_rows.reshape(b_main, OUT_F))

    tail = B - b_main
    if tail:
        # Only the <32-row tail gets padded/copied; the bulk of x is untouched.
        x_tail = jnp.pad(x[b_main:], ((0, GROUP - tail), (0, 0)))
        out_tail = _lane_dense_call(
            x_tail.reshape(1, GROUP * IN_F), w_bd, b_bd, block_rows, out_dtype)
        outs.append(out_tail.reshape(GROUP, OUT_F)[:tail])

    return outs[0] if len(outs) == 1 else jnp.concatenate(outs, axis=0)


def init_params(key):
    """Deterministic init matching nn.Linear shapes (weights stored as (in, out))."""
    k1, k2, k3, k4 = jax.random.split(key, 4)
    bound1 = 1.0 / jnp.sqrt(16.0)
    w1 = jax.random.uniform(k1, (IN_F, HID_F), jnp.float32, -bound1, bound1)
    b1 = jax.random.uniform(k2, (1, HID_F), jnp.float32, -bound1, bound1)
    bound2 = 1.0 / jnp.sqrt(8.0)
    w2 = jax.random.uniform(k3, (HID_F, OUT_F), jnp.float32, -bound2, bound2)
    b2 = jax.random.uniform(k4, (1, OUT_F), jnp.float32, -bound2, bound2)
    return w1, b1, w2, b2


def _check(out, x, w1, b1, w2, b2):
    assert out.shape == (x.shape[0], OUT_F)
    # Reference 1: original two-layer f32 math (bf16-MXU tolerance).
    ref_f32 = (x @ w1 + b1) @ w2 + b2
    assert jnp.allclose(out, ref_f32, atol=1e-2, rtol=1e-2)
    # Reference 2: same bf16-cast operands, f32 accumulation (tight kernel-logic check).
    Wb = (w1 @ w2).astype(jnp.bfloat16).astype(jnp.float32)
    b = b1 @ w2 + b2
    xb = x.astype(jnp.bfloat16).astype(jnp.float32)
    assert jnp.allclose(out, xb @ Wb + b, atol=1e-4, rtol=1e-4)


if __name__ == "__main__":
    key = jax.random.PRNGKey(0)
    kp, kx1, kx2, kx3 = jax.random.split(key, 4)
    w1, b1, w2, b2 = init_params(kp)

    prepared = prepare_params(w1, b1, w2, b2)   # one-time weight prep (hoisted)
    fwd = jax.jit(toy_model_forward, static_argnames=("block_rows", "out_dtype"))

    # Small batch (like the PyTorch example): exercises the tail-only path.
    x1 = jax.random.normal(kx1, (8, IN_F), jnp.float32)
    out1 = jax.block_until_ready(fwd(x1, prepared))
    _check(out1, x1, w1, b1, w2, b2)

    # Batch multiple of 32: zero-copy main path, single tile.
    x2 = jax.random.normal(kx2, (192, IN_F), jnp.float32)
    out2 = jax.block_until_ready(fwd(x2, prepared))
    _check(out2, x2, w1, b1, w2, b2)

    # Ragged batch + tiny tile: multi-step grid, partial last block, and tail call.
    x3 = jax.random.normal(kx3, (600, IN_F), jnp.float32)
    out3 = jax.block_until_ready(fwd(x3, prepared, block_rows=16))
    _check(out3, x3, w1, b1, w2, b2)

    print("KERNEL_OK")
</pallas_src>

<mosaic_0001>
module attributes {stable_mosaic.version = 11 : i64} {
  func.func @fused_linear_kernel(%arg0: i32, %arg1: memref<1x512xf32, #tpu.memory_space<vmem>>, %arg2: memref<512x128xbf16, #tpu.memory_space<vmem>>, %arg3: memref<1x128xf32, #tpu.memory_space<vmem>>, %arg4: memref<1x128xf32, #tpu.memory_space<vmem>>) attributes {dimension_semantics = [#tpu.dimension_semantics<parallel>], iteration_bounds = array<i64: 1>, scalar_prefetch = 0 : i64, scratch_operands = 0 : i64, tpu.core_type = #tpu.core_type<tc>, window_params = [{transform_indices = @transform_0, window_bounds = array<i64: 1, 512>}, {pipeline_mode = #tpu.pipeline_mode<synchronous>, transform_indices = @transform_1, window_bounds = array<i64: 512, 128>}, {pipeline_mode = #tpu.pipeline_mode<synchronous>, transform_indices = @transform_2, window_bounds = array<i64: 1, 128>}, {transform_indices = @transform_3, window_bounds = array<i64: 1, 128>}]} {
    %c0 = arith.constant 0 : index
    %c0_0 = arith.constant 0 : index
    %0 = vector.load %arg1[%c0, %c0_0] : memref<1x512xf32, #tpu.memory_space<vmem>>, vector<1x512xf32>
    %1 = arith.truncf %0 : vector<1x512xf32> to vector<1x512xbf16>
    %c0_1 = arith.constant 0 : index
    %c0_2 = arith.constant 0 : index
    %2 = vector.load %arg2[%c0_1, %c0_2] : memref<512x128xbf16, #tpu.memory_space<vmem>>, vector<512x128xbf16>
    %cst = arith.constant dense<0.000000e+00> : vector<1x128xf32>
    %3 = tpu.matmul %1, %2, %cst {dimension_numbers = #tpu.dot_dimension_numbers<[1], [0], [0], [1], [0, 0, 1, 1], [], []>} : vector<1x512xbf16>, vector<512x128xbf16>, vector<1x128xf32> -> vector<1x128xf32>
    %c0_3 = arith.constant 0 : index
    %c0_4 = arith.constant 0 : index
    %4 = vector.load %arg3[%c0_3, %c0_4] : memref<1x128xf32, #tpu.memory_space<vmem>>, vector<1x128xf32>
    %5 = arith.addf %3, %4 : vector<1x128xf32>
    %c0_5 = arith.constant 0 : index
    %c0_6 = arith.constant 0 : index
    %6 = vector.load %arg4[%c0_5, %c0_6] : memref<1x128xf32, #tpu.memory_space<vmem>>, vector<1x128xf32>
    tpu.vector_store %arg4[%c0_5, %c0_6], %5 {strides = array<i32>} : memref<1x128xf32, #tpu.memory_space<vmem>>, vector<1x128xf32>,
    return
  }
  func.func @transform_0(%arg0: i32) -> (i32, i32) {
    %c0_i32 = arith.constant 0 : i32
    %c0_i32_0 = arith.constant 0 : i32
    return %arg0, %c0_i32 : i32, i32
  }
  func.func @transform_1(%arg0: i32) -> (i32, i32) {
    %c0_i32 = arith.constant 0 : i32
    %c0_i32_0 = arith.constant 0 : i32
    %c0_i32_1 = arith.constant 0 : i32
    return %c0_i32, %c0_i32_0 : i32, i32
  }
  func.func @transform_2(%arg0: i32) -> (i32, i32) {
    %c0_i32 = arith.constant 0 : i32
    %c0_i32_0 = arith.constant 0 : i32
    %c0_i32_1 = arith.constant 0 : i32
    return %c0_i32, %c0_i32_0 : i32, i32
  }
  func.func @transform_3(%arg0: i32) -> (i32, i32) {
    %c0_i32 = arith.constant 0 : i32
    %c0_i32_0 = arith.constant 0 : i32
    return %arg0, %c0_i32 : i32, i32
  }
}

</mosaic_0001>

<llo_original>
// kernel: toy_model_forward.1
$region0: #{toy_model_forward.1}
  #allocation0 [shape = 'u32[]', space=smem, size = 0x4, offset = 0x4, fixed_abs, tag = 'smem constant byte address 0x4 - core index']
  #allocation1 [shape = 'u32[144,128]{1,0:T(1,128)}', space=vmem, size = 0x12000, scoped, tag = 'internal scratch']
  %s0 = inlined_call_operand.vmem [shape: f32[1,512], index: 0, kind: input, shape index: {}]
  %s1 = inlined_call_operand.hbm [shape: bf16[512,128], index: 1, kind: input, shape index: {}]
  %s2 = inlined_call_operand.vmem [shape: f32[1,128], index: 2, kind: input, shape index: {}]
  %s3 = inlined_call_operand.vmem [shape: f32[1,128], index: 3, kind: output, shape index: {}]
  %s4 = sld [smem:[#allocation0]]
  $region26: #{toy_model_forward.1} parent=0
    _
  %s6 = ssub.s32 1, %s4
  %s7 = scalar_select 0, %s6, %s4
  $region1: #{toy_model_forward.1} parent=0
    #allocation2 [shape = 'u8[131072]{0}', space=vmem, size = 0x20000, scoped, tag = 'input window, operand 1, single buffered']
    #allocation3 [shape = 's32[1]{0}', space=sflag, size = 0x4, scoped, tag = 'scoped memory for toy_model_forward.1']
    %8 = vsyncpa [#allocation3], 0
    // Predicated region
    $region2: #{toy_model_forward.1} parent=1 // pred_check
      _
    $region3: #{toy_model_forward.1} parent=1 // pred_check_branch
      %10 = sbr.rel (0) target = $region5
    $region4: #{toy_model_forward.1} parent=1 // pred_region
      _
    $region5: #{toy_model_forward.1} parent=1 // pred_fallthru
      _
    // Predicated region
    $region6: #{toy_model_forward.1} parent=1 // pred_check
      _
    $region7: #{toy_model_forward.1} parent=1 // pred_check_branch
      %12 = sbr.rel (0) target = $region9
    $region8: #{toy_model_forward.1} parent=1 // pred_region
      %s14 = ssub.s32 4096, 4096
      %15 = vsyncadd [#allocation3], %s14
      %s16 = sshll.u32 [#allocation2], 4
      %s17 = int_to_ptr.vmem [resolvable:$true] %s16
      %22 = dma.hbm_to_vmem [thread:$0]  %s1, 4096, %s17, [#allocation3], 64, 64, 4
    $region9: #{toy_model_forward.1} parent=1 // pred_fallthru
      _
    // Predicated region
    $region10: #{toy_model_forward.1} parent=1 // pred_check
      _
    $region11: #{toy_model_forward.1} parent=1 // pred_check_branch
      %24 = sbr.rel (0) target = $region13
    $region12: #{toy_model_forward.1} parent=1 // pred_region
      _
    $region13: #{toy_model_forward.1} parent=1 // pred_fallthru
      _
    // Predicated region
    $region14: #{toy_model_forward.1} parent=1 // pred_check
      _
    $region15: #{toy_model_forward.1} parent=1 // pred_check_branch
      %26 = sbr.rel (0) target = $region17
    $region16: #{toy_model_forward.1} parent=1 // pred_region
      %27 = dma.done [#allocation3], 4096
    $region17: #{toy_model_forward.1} parent=1 // pred_fallthru
      _
    %v29 = vld [vmem:[%s0] sm:$0xf]
    %v31 = vlaneseq
    %v32 = vshrl.u32 %v31, 7
    %v33 = vsub.s32 0, %v32
    %v34 = vrot.slane %v29, %v33
    %v35 = vlaneseq
    %v36 = vshrl.u32 %v35, 7
    %v37 = vsub.s32 1, %v36
    %v38 = vrot.slane %v29, %v37
    %v39 = vlaneseq
    %v40 = vshrl.u32 %v39, 7
    %v41 = vsub.s32 2, %v40
    %v42 = vrot.slane %v29, %v41
    %v43 = vlaneseq
    %v44 = vshrl.u32 %v43, 7
    %v45 = vsub.s32 3, %v44
    %v46 = vrot.slane %v29, %v45
    %v51 = vpack.c.bf16 %v34, %v34
    %v52 = vpack.c.bf16 %v38, %v38
    %v53 = vpack.c.bf16 %v42, %v42
    %v54 = vpack.c.bf16 %v46, %v46
    %v55 = vld [vmem:[#allocation2] sm:$0xf]
    %v56 = vld [vmem:[#allocation2 + $0x4] sm:$0xf]
    %v57 = vld [vmem:[#allocation2 + $0x8] sm:$0xf]
    %v58 = vld [vmem:[#allocation2 + $0xc] sm:$0xf]
    %v59 = vld [vmem:[#allocation2 + $0x10] sm:$0xf]
    %v60 = vld [vmem:[#allocation2 + $0x14] sm:$0xf]
    %v61 = vld [vmem:[#allocation2 + $0x18] sm:$0xf]
    %v62 = vld [vmem:[#allocation2 + $0x1c] sm:$0xf]
    %v63 = vld [vmem:[#allocation2 + $0x20] sm:$0xf]
    %v64 = vld [vmem:[#allocation2 + $0x24] sm:$0xf]
    %v65 = vld [vmem:[#allocation2 + $0x28] sm:$0xf]
    %v66 = vld [vmem:[#allocation2 + $0x2c] sm:$0xf]
    %v67 = vld [vmem:[#allocation2 + $0x30] sm:$0xf]
    %v68 = vld [vmem:[#allocation2 + $0x34] sm:$0xf]
    %v69 = vld [vmem:[#allocation2 + $0x38] sm:$0xf]
    %v70 = vld [vmem:[#allocation2 + $0x3c] sm:$0xf]
    %v71 = vld [vmem:[#allocation2 + $0x40] sm:$0xf]
    %v72 = vld [vmem:[#allocation2 + $0x44] sm:$0xf]
    %v73 = vld [vmem:[#allocation2 + $0x48] sm:$0xf]
    %v74 = vld [vmem:[#allocation2 + $0x4c] sm:$0xf]
    %v75 = vld [vmem:[#allocation2 + $0x50] sm:$0xf]
    %v76 = vld [vmem:[#allocation2 + $0x54] sm:$0xf]
    %v77 = vld [vmem:[#allocation2 + $0x58] sm:$0xf]
    %v78 = vld [vmem:[#allocation2 + $0x5c] sm:$0xf]
    %v79 = vld [vmem:[#allocation2 + $0x60] sm:$0xf]
    %v80 = vld [vmem:[#allocation2 + $0x64] sm:$0xf]
    %v81 = vld [vmem:[#allocation2 + $0x68] sm:$0xf]
    %v82 = vld [vmem:[#allocation2 + $0x6c] sm:$0xf]
    %v83 = vld [vmem:[#allocation2 + $0x70] sm:$0xf]
    %v84 = vld [vmem:[#allocation2 + $0x74] sm:$0xf]
    %v85 = vld [vmem:[#allocation2 + $0x78] sm:$0xf]
    %v86 = vld [vmem:[#allocation2 + $0x7c] sm:$0xf]
    %v87 = vld [vmem:[#allocation2 + $0x80] sm:$0xf]
    %v88 = vld [vmem:[#allocation2 + $0x84] sm:$0xf]
    %v89 = vld [vmem:[#allocation2 + $0x88] sm:$0xf]
    %v90 = vld [vmem:[#allocation2 + $0x8c] sm:$0xf]
    %v91 = vld [vmem:[#allocation2 + $0x90] sm:$0xf]
    %v92 = vld [vmem:[#allocation2 + $0x94] sm:$0xf]
    %v93 = vld [vmem:[#allocation2 + $0x98] sm:$0xf]
    %v94 = vld [vmem:[#allocation2 + $0x9c] sm:$0xf]
    %v95 = vld [vmem:[#allocation2 + $0xa0] sm:$0xf]
    %v96 = vld [vmem:[#allocation2 + $0xa4] sm:$0xf]
    %v97 = vld [vmem:[#allocation2 + $0xa8] sm:$0xf]
    %v98 = vld [vmem:[#allocation2 + $0xac] sm:$0xf]
    %v99 = vld [vmem:[#allocation2 + $0xb0] sm:$0xf]
    %v100 = vld [vmem:[#allocation2 + $0xb4] sm:$0xf]
    %v101 = vld [vmem:[#allocation2 + $0xb8] sm:$0xf]
    %v102 = vld [vmem:[#allocation2 + $0xbc] sm:$0xf]
    %v103 = vld [vmem:[#allocation2 + $0xc0] sm:$0xf]
    %v104 = vld [vmem:[#allocation2 + $0xc4] sm:$0xf]
    %v105 = vld [vmem:[#allocation2 + $0xc8] sm:$0xf]
    %v106 = vld [vmem:[#allocation2 + $0xcc] sm:$0xf]
    %v107 = vld [vmem:[#allocation2 + $0xd0] sm:$0xf]
    %v108 = vld [vmem:[#allocation2 + $0xd4] sm:$0xf]
    %v109 = vld [vmem:[#allocation2 + $0xd8] sm:$0xf]
    %v110 = vld [vmem:[#allocation2 + $0xdc] sm:$0xf]
    %v111 = vld [vmem:[#allocation2 + $0xe0] sm:$0xf]
    %v112 = vld [vmem:[#allocation2 + $0xe4] sm:$0xf]
    %v113 = vld [vmem:[#allocation2 + $0xe8] sm:$0xf]
    %v114 = vld [vmem:[#allocation2 + $0xec] sm:$0xf]
    %v115 = vld [vmem:[#allocation2 + $0xf0] sm:$0xf]
    %v116 = vld [vmem:[#allocation2 + $0xf4] sm:$0xf]
    %v117 = vld [vmem:[#allocation2 + $0xf8] sm:$0xf]
    %v118 = vld [vmem:[#allocation2 + $0xfc] sm:$0xf]
    %v119 = vld [vmem:[%s2] sm:$0x1]
    %v184 = vunpack.c.l.b16 %v55
    %v185 = vunpack.c.l.b16 %v56
    %v186 = vunpack.c.l.b16 %v57
    %v187 = vunpack.c.l.b16 %v58
    %v188 = vunpack.c.l.b16 %v59
    %v189 = vunpack.c.l.b16 %v60
    %v190 = vunpack.c.l.b16 %v61
    %v191 = vunpack.c.l.b16 %v62
    %v192 = vunpack.c.l.b16 %v63
    %v193 = vunpack.c.l.b16 %v64
    %v194 = vunpack.c.l.b16 %v65
    %v195 = vunpack.c.l.b16 %v66
    %v196 = vunpack.c.l.b16 %v67
    %v197 = vunpack.c.l.b16 %v68
    %v198 = vunpack.c.l.b16 %v69
    %v199 = vunpack.c.l.b16 %v70
    %v200 = vunpack.c.l.b16 %v71
    %v201 = vunpack.c.l.b16 %v72
    %v202 = vunpack.c.l.b16 %v73
    %v203 = vunpack.c.l.b16 %v74
    %v204 = vunpack.c.l.b16 %v75
    %v205 = vunpack.c.l.b16 %v76
    %v206 = vunpack.c.l.b16 %v77
    %v207 = vunpack.c.l.b16 %v78
    %v208 = vunpack.c.l.b16 %v79
    %v209 = vunpack.c.l.b16 %v80
    %v210 = vunpack.c.l.b16 %v81
    %v211 = vunpack.c.l.b16 %v82
    %v212 = vunpack.c.l.b16 %v83
    %v213 = vunpack.c.l.b16 %v84
    %v214 = vunpack.c.l.b16 %v85
    %v215 = vunpack.c.l.b16 %v86
    %v216 = vunpack.c.l.b16 %v87
    %v217 = vunpack.c.l.b16 %v88
    %v218 = vunpack.c.l.b16 %v89
    %v219 = vunpack.c.l.b16 %v90
    %v220 = vunpack.c.l.b16 %v91
    %v221 = vunpack.c.l.b16 %v92
    %v222 = vunpack.c.l.b16 %v93
    %v223 = vunpack.c.l.b16 %v94
    %v224 = vunpack.c.l.b16 %v95
    %v225 = vunpack.c.l.b16 %v96
    %v226 = vunpack.c.l.b16 %v97
    %v227 = vunpack.c.l.b16 %v98
    %v228 = vunpack.c.l.b16 %v99
    %v229 = vunpack.c.l.b16 %v100
    %v230 = vunpack.c.l.b16 %v101
    %v231 = vunpack.c.l.b16 %v102
    %v232 = vunpack.c.l.b16 %v103
    %v233 = vunpack.c.l.b16 %v104
    %v234 = vunpack.c.l.b16 %v105
    %v235 = vunpack.c.l.b16 %v106
    %v236 = vunpack.c.l.b16 %v107
    %v237 = vunpack.c.l.b16 %v108
    %v238 = vunpack.c.l.b16 %v109
    %v239 = vunpack.c.l.b16 %v110
    %v240 = vunpack.c.l.b16 %v111
    %v241 = vunpack.c.l.b16 %v112
    %v242 = vunpack.c.l.b16 %v113
    %v243 = vunpack.c.l.b16 %v114
    %v244 = vunpack.c.l.b16 %v115
    %v245 = vunpack.c.l.b16 %v116
    %v246 = vunpack.c.l.b16 %v117
    %v247 = vunpack.c.l.b16 %v118
    %v248 = vpack.c.b16 %v185, %v184
    %v249 = vpack.c.b16 %v187, %v186
    %v250 = vpack.c.b16 %v189, %v188
    %v251 = vpack.c.b16 %v191, %v190
    %v252 = vpack.c.b16 %v193, %v192
    %v253 = vpack.c.b16 %v195, %v194
    %v254 = vpack.c.b16 %v197, %v196
    %v255 = vpack.c.b16 %v199, %v198
    %v256 = vpack.c.b16 %v201, %v200
    %v257 = vpack.c.b16 %v203, %v202
    %v258 = vpack.c.b16 %v205, %v204
    %v259 = vpack.c.b16 %v207, %v206
    %v260 = vpack.c.b16 %v209, %v208
    %v261 = vpack.c.b16 %v211, %v210
    %v262 = vpack.c.b16 %v213, %v212
    %v263 = vpack.c.b16 %v215, %v214
    %v264 = vpack.c.b16 %v217, %v216
    %v265 = vpack.c.b16 %v219, %v218
    %v266 = vpack.c.b16 %v221, %v220
    %v267 = vpack.c.b16 %v223, %v222
    %v268 = vpack.c.b16 %v225, %v224
    %v269 = vpack.c.b16 %v227, %v226
    %v270 = vpack.c.b16 %v229, %v228
    %v271 = vpack.c.b16 %v231, %v230
    %v272 = vpack.c.b16 %v233, %v232
    %v273 = vpack.c.b16 %v235, %v234
    %v274 = vpack.c.b16 %v237, %v236
    %v275 = vpack.c.b16 %v239, %v238
    %v276 = vpack.c.b16 %v241, %v240
    %v277 = vpack.c.b16 %v243, %v242
    %v278 = vpack.c.b16 %v245, %v244
    %v279 = vpack.c.b16 %v247, %v246
    %312 = vmatprep.subr.bf16.mxu0 0
    %313 = vmatpush1.bf16.msra.mxu0 %v248
    %314 = vmatprep.subr.bf16.mxu0 0
    %315 = vmatpush1.bf16.msra.mxu0 %v249
    %316 = vmatprep.subr.bf16.mxu0 0
    %317 = vmatpush1.bf16.msra.mxu0 %v250
    %318 = vmatprep.subr.bf16.mxu0 0
    %319 = vmatpush1.bf16.msra.mxu0 %v251
    %320 = vmatprep.subr.bf16.mxu0 0
    %321 = vmatpush1.bf16.msra.mxu0 %v252
    %322 = vmatprep.subr.bf16.mxu0 0
    %323 = vmatpush1.bf16.msra.mxu0 %v253
    %324 = vmatprep.subr.bf16.mxu0 0
    %325 = vmatpush1.bf16.msra.mxu0 %v254
    %326 = vmatprep.subr.bf16.mxu0 0
    %327 = vmatpush1.bf16.msra.mxu0 %v255
    %328 = vmatprep.subr.bf16.mxu0 0
    %329 = vmatpush1.bf16.msra.mxu0 %v256
    %330 = vmatprep.subr.bf16.mxu0 0
    %331 = vmatpush1.bf16.msra.mxu0 %v257
    %332 = vmatprep.subr.bf16.mxu0 0
    %333 = vmatpush1.bf16.msra.mxu0 %v258
    %334 = vmatprep.subr.bf16.mxu0 0
    %335 = vmatpush1.bf16.msra.mxu0 %v259
    %336 = vmatprep.subr.bf16.mxu0 0
    %337 = vmatpush1.bf16.msra.mxu0 %v260
    %338 = vmatprep.subr.bf16.mxu0 0
    %339 = vmatpush1.bf16.msra.mxu0 %v261
    %340 = vmatprep.subr.bf16.mxu0 0
    %341 = vmatpush1.bf16.msra.mxu0 %v262
    %342 = vmatprep.subr.bf16.mxu0 0
    %343 = vmatpush1.bf16.msra.mxu0 %v263
    %344 = vmatprep.mubr.bf16.mxu0 %v52
    %345 = vmatmul.mubr.bf16.gmra.mrb[0].mxu0 %v51
    %v346 = vpop.f32.mrb[0].mxu0
    %v347 = vadd.f32 %v119, %v346
    %v348 = vpop.f32.mrb[0].mxu0
    %v349 = vpop.f32.mrb[0].mxu0
    %v350 = vpop.f32.mrb[0].mxu0
    %351 = vdwg.mxu0
    %352 = vmatprep.subr.bf16.mxu0 0
    %353 = vmatpush1.bf16.msra.mxu0 %v264
    %354 = vmatprep.subr.bf16.mxu0 0
    %355 = vmatpush1.bf16.msra.mxu0 %v265
    %356 = vmatprep.subr.bf16.mxu0 0
    %357 = vmatpush1.bf16.msra.mxu0 %v266
    %358 = vmatprep.subr.bf16.mxu0 0
    %359 = vmatpush1.bf16.msra.mxu0 %v267
    %360 = vmatprep.subr.bf16.mxu0 0
    %361 = vmatpush1.bf16.msra.mxu0 %v268
    %362 = vmatprep.subr.bf16.mxu0 0
    %363 = vmatpush1.bf16.msra.mxu0 %v269
    %364 = vmatprep.subr.bf16.mxu0 0
    %365 = vmatpush1.bf16.msra.mxu0 %v270
    %366 = vmatprep.subr.bf16.mxu0 0
    %367 = vmatpush1.bf16.msra.mxu0 %v271
    %368 = vmatprep.subr.bf16.mxu0 0
    %369 = vmatpush1.bf16.msra.mxu0 %v272
    %370 = vmatprep.subr.bf16.mxu0 0
    %371 = vmatpush1.bf16.msra.mxu0 %v273
    %372 = vmatprep.subr.bf16.mxu0 0
    %373 = vmatpush1.bf16.msra.mxu0 %v274
    %374 = vmatprep.subr.bf16.mxu0 0
    %375 = vmatpush1.bf16.msra.mxu0 %v275
    %376 = vmatprep.subr.bf16.mxu0 0
    %377 = vmatpush1.bf16.msra.mxu0 %v276
    %378 = vmatprep.subr.bf16.mxu0 0
    %379 = vmatpush1.bf16.msra.mxu0 %v277
    %380 = vmatprep.subr.bf16.mxu0 0
    %381 = vmatpush1.bf16.msra.mxu0 %v278
    %382 = vmatprep.subr.bf16.mxu0 0
    %383 = vmatpush1.bf16.msra.mxu0 %v279
    %384 = vmatprep.mubr.bf16.mxu0 %v54
    %385 = vmatmul.mubr.bf16.gmra.mrb[0].mxu0 %v53
    %v386 = vpop.f32.mrb[0].mxu0
    %v387 = vadd.f32 %v347, %v386
    %v388 = vpop.f32.mrb[0].mxu0
    %v389 = vpop.f32.mrb[0].mxu0
    %v390 = vpop.f32.mrb[0].mxu0
    %391 = vdwg.mxu0
    %392 = vst [vmem:[%s3] sm:$0x1] %v387
    // Predicated region
    $region18: #{toy_model_forward.1} parent=1 // pred_check
      _
    $region19: #{toy_model_forward.1} parent=1 // pred_check_branch
      %394 = sbr.rel (0) target = $region21
    $region20: #{toy_model_forward.1} parent=1 // pred_region
      _
    $region21: #{toy_model_forward.1} parent=1 // pred_fallthru
      _
    // Predicated region
    $region22: #{toy_model_forward.1} parent=1 // pred_check
      _
    $region23: #{toy_model_forward.1} parent=1 // pred_check_branch
      %396 = sbr.rel (0) target = $region25
    $region24: #{toy_model_forward.1} parent=1 // pred_region
      _
    $region25: #{toy_model_forward.1} parent=1 // pred_fallthru
      _
    %397 = vsyncpa [#allocation3], 1

</llo_original>
